<compile_context>
chip_gen: v7x
topology: tpu7x:2x2x1
jax: 0.10.0
libtpu: 0.0.40
codegen_flags: <defaults>
</compile_context>

<pallas_src>
import functools

import numpy as np

import jax
import jax.numpy as jnp
from jax.experimental import pallas as pl
from jax.experimental.pallas import tpu as pltpu

_BN_EPS = 1e-5


# ---------------------------------------------------------------------------
# pltpu.roll direction probe (tiny one-off kernel, cached).
# Makes the conv-tap shifts robust to the rotate-direction convention of the
# hardware roll primitive: we need  rolled[i] == h[(i + s) % n].
# ---------------------------------------------------------------------------
def _roll_probe_kernel(x_ref, o_ref):
    o_ref[...] = pltpu.roll(x_ref[...], shift=1, axis=1)


@functools.lru_cache(maxsize=None)
def _roll_sign() -> int:
    """Return r such that pltpu.roll(x, (r*s) % n, axis)[..., i] == x[..., (i+s) % n]."""
    with jax.ensure_compile_time_eval():
        x = jnp.broadcast_to(jnp.arange(128, dtype=jnp.float32)[None, :], (8, 128))
        y = pl.pallas_call(
            _roll_probe_kernel,
            out_shape=jax.ShapeDtypeStruct((8, 128), jnp.float32),
        )(x)
        # numpy convention: roll(x, 1)[0] == x[-1]  ->  shift must be -s.
        return -1 if bool(y[0, 0] == 127.0) else 1


# ---------------------------------------------------------------------------
# Fused CtxBottle13 kernel (one grid step == one image)
#   x_ref    : (1, C1, H*W)   f32    input image, channels-first, lanes = H*W
#   w1_ref   : (C_, C1)       bf16   1x1 conv weight with BN scale folded in
#   b1_ref   : (C_, 1)        f32    folded BN bias
#   w2_ref   : (C2, 9*C_)     bf16   3x3 conv weight, tap-major im2col layout
#   mask_ref : (8, H*W)       f32    per-tap border masks (non-center taps,
#                                    kernel loop order)
#   o_ref    : (1, C2, H*W)   f32    output
# ---------------------------------------------------------------------------
def _ctx_bottle13_kernel(x_ref, w1_ref, b1_ref, w2_ref, mask_ref, o_ref,
                         *, H, W, roll_sign, shortcut):
    HW = H * W
    f32 = jnp.float32
    cdt = w2_ref.dtype                       # compute dtype for MXU operands

    # ---- cv1: 1x1 conv (BN scale pre-folded) + bias + SiLU; h stays in VMEM
    x = x_ref[0]                                                   # (C1, HW) f32
    h = jnp.dot(w1_ref[...], x.astype(cdt),
                preferred_element_type=f32)                        # (C_, HW) f32
    h = h + b1_ref[...]                                            # (C_, 1) bcast
    h = h * jax.nn.sigmoid(h)                                      # SiLU (f32)
    hc = h.astype(cdt)

    # ---- cv2: 3x3 conv (stride 1, pad 1) as a single in-VMEM im2col matmul.
    # Output pixel i = (r, c) needs h at (r+dy, c+dx).  In the flattened
    # (C, H*W) layout that is a lane roll by s = dy*W + dx plus a zero mask
    # wherever the neighbour falls outside the image (the conv zero padding).
    # The 9 shifted taps are stacked along channels and contracted at once.
    taps = []
    mi = 0
    for dy in (-1, 0, 1):
        for dx in (-1, 0, 1):
            s = dy * W + dx
            if s == 0:
                taps.append(hc)
            else:
                t = pltpu.roll(h, shift=(roll_sign * s) % HW, axis=1)
                t = t * mask_ref[mi:mi + 1, :]    # zero wrapped border pixels
                mi += 1
                taps.append(t.astype(cdt))
    im2col = jnp.concatenate(taps, axis=0)                         # (9*C_, HW)
    acc = jnp.dot(w2_ref[...], im2col,
                  preferred_element_type=f32)                      # (C2, HW) f32

    if shortcut:                              # only legal when C1 == C2
        acc = acc + x

    o_ref[0] = (acc * jax.nn.sigmoid(acc)).astype(o_ref.dtype)     # final SiLU


# ---------------------------------------------------------------------------
# Wrapper: NCHW in -> NCHW out (PyTorch layout, no transposes / no HBM casts)
# ---------------------------------------------------------------------------
def ctx_bottle13_forward(x_nchw, params, *, shortcut=False,
                         compute_dtype=jnp.bfloat16):
    N, C1, H, W = x_nchw.shape
    HW = H * W

    # Fold BN (inference mode, default running stats) into the 1x1 conv.
    w1 = params["cv1_w"]                       # (C_, C1)  == PyTorch (Cout, Cin)
    gamma, beta, mean, var = params["cv1_bn"]
    scale = gamma / jnp.sqrt(var + _BN_EPS)
    bias = beta - mean * scale
    w1f = (w1 * scale[:, None]).astype(compute_dtype)
    b1 = bias[:, None].astype(jnp.float32)     # (C_, 1)

    # 3x3 weight -> im2col layout: column index = (ky*3+kx)*C_ + cin
    w2 = params["cv2_w"]                       # (C2, C_, 3, 3) PyTorch layout
    C2, C_ = w2.shape[0], w2.shape[1]
    w2f = jnp.transpose(w2, (0, 2, 3, 1)).reshape(C2, 9 * C_).astype(compute_dtype)

    if shortcut:
        assert C1 == C2, "shortcut add requires c1 == c2"

    # Per-tap border-validity masks (8 non-center taps, kernel loop order).
    r = np.arange(HW) // W
    c = np.arange(HW) % W
    mlist = []
    for dy in (-1, 0, 1):
        for dx in (-1, 0, 1):
            if (dy, dx) == (0, 0):
                continue
            m = np.ones(HW, np.bool_)
            if dy == -1:
                m &= r >= 1
            elif dy == 1:
                m &= r <= H - 2
            if dx == -1:
                m &= c >= 1
            elif dx == 1:
                m &= c <= W - 2
            mlist.append(m)
    masks = jnp.asarray(np.stack(mlist).astype(np.float32))   # (8, HW) f32

    x2 = x_nchw.reshape(N, C1, HW)             # free reshape; stays f32 in HBM

    out = pl.pallas_call(
        functools.partial(_ctx_bottle13_kernel, H=H, W=W,
                          roll_sign=_roll_sign(), shortcut=shortcut),
        out_shape=jax.ShapeDtypeStruct((N, C2, HW), jnp.float32),
        grid_spec=pltpu.PrefetchScalarGridSpec(
            num_scalar_prefetch=0,
            grid=(N,),
            in_specs=[
                pl.BlockSpec((1, C1, HW), lambda n: (n, 0, 0)),
                pl.BlockSpec((C_, C1), lambda n: (0, 0)),
                pl.BlockSpec((C_, 1), lambda n: (0, 0)),
                pl.BlockSpec((C2, 9 * C_), lambda n: (0, 0)),
                pl.BlockSpec((8, HW), lambda n: (0, 0)),
            ],
            out_specs=pl.BlockSpec((1, C2, HW), lambda n: (n, 0, 0)),
        ),
        compiler_params=pltpu.CompilerParams(
            dimension_semantics=("parallel",)),
    )(x2, w1f, b1, w2f, masks)

    return out.reshape(N, C2, H, W)


# ---------------------------------------------------------------------------
# Pure-JAX reference (for in-script validation)
# ---------------------------------------------------------------------------
def ctx_bottle13_reference(x_nchw, params, *, shortcut=False):
    w1 = params["cv1_w"]
    gamma, beta, mean, var = params["cv1_bn"]
    h = jnp.einsum("nchw,oc->nohw", x_nchw, w1)
    scale = gamma / jnp.sqrt(var + _BN_EPS)
    bias = beta - mean * scale
    h = h * scale[None, :, None, None] + bias[None, :, None, None]
    h = h * jax.nn.sigmoid(h)
    y = jax.lax.conv_general_dilated(
        h, params["cv2_w"], window_strides=(1, 1), padding=((1, 1), (1, 1)),
        dimension_numbers=("NCHW", "OIHW", "NCHW"))
    if shortcut:
        y = y + x_nchw
    return y * jax.nn.sigmoid(y)


# ---------------------------------------------------------------------------
# Deterministic parameter init (kaiming-style); BN at PyTorch defaults.
# ---------------------------------------------------------------------------
def _kaiming(key, shape, fan_in):
    return jax.random.normal(key, shape, jnp.float32) * jnp.sqrt(2.0 / fan_in)


def _bn_params(c):
    return (jnp.ones((c,), jnp.float32),    # gamma
            jnp.zeros((c,), jnp.float32),   # beta
            jnp.zeros((c,), jnp.float32),   # running_mean
            jnp.ones((c,), jnp.float32))    # running_var


def init_ctx_bottle13_params(key, c1, c2, e=1.0):
    c_ = int(c2 * e)
    k1, k2 = jax.random.split(key)
    return {
        "cv1_w": _kaiming(k1, (c_, c1), fan_in=c1),            # 1x1 conv (Cout, Cin)
        "cv1_bn": _bn_params(c_),                               # BN (inference defaults)
        "cv2_w": _kaiming(k2, (c2, c_, 3, 3), fan_in=9 * c_),   # 3x3 conv (Cout, Cin, 3, 3)
    }


# ---------------------------------------------------------------------------
if __name__ == "__main__":
    # CtxBottle13(c1=8, c2=16, shortcut=False, e=1)
    N, C1, C2, H, W = 2, 8, 16, 16, 16

    key = jax.random.PRNGKey(0)
    k_x, k_p = jax.random.split(key)
    x = jax.random.normal(k_x, (N, C1, H, W), jnp.float32)     # NCHW, like PyTorch
    params = init_ctx_bottle13_params(k_p, C1, C2)

    _ = _roll_sign()                     # warm the (cached) probe outside jit

    fwd = jax.jit(ctx_bottle13_forward)
    out = fwd(x, params)
    jax.block_until_ready(out)

    assert out.shape == (N, C2, H, W), out.shape
    assert bool(jnp.all(jnp.isfinite(out)))

    # Validate against the plain-JAX reference (bf16 matmul operands -> loose tol).
    ref = ctx_bottle13_reference(x, params)
    rel_err = float(jnp.max(jnp.abs(out - ref)) / (jnp.max(jnp.abs(ref)) + 1e-6))
    assert rel_err < 5e-2, f"rel_err={rel_err}"

    print("KERNEL_OK")
</pallas_src>

<mosaic_0001>
module attributes {stable_mosaic.version = 11 : i64} {
  func.func @_roll_probe_kernel(%arg0: memref<8x128xf32, #tpu.memory_space<vmem>>, %arg1: memref<8x128xf32, #tpu.memory_space<vmem>>) attributes {dimension_semantics = [], scalar_prefetch = 0 : i64, scratch_operands = 0 : i64, tpu.core_type = #tpu.core_type<tc>} {
    %c0 = arith.constant 0 : index
    %c0_0 = arith.constant 0 : index
    %0 = vector.load %arg0[%c0, %c0_0] : memref<8x128xf32, #tpu.memory_space<vmem>>, vector<8x128xf32>
    %c1_i32 = arith.constant 1 : i32
    %1 = tpu.dynamic_rotate %0 by %c1_i32 dim 1 : vector<8x128xf32>, i32 -> vector<8x128xf32>
    %c0_1 = arith.constant 0 : index
    %c0_2 = arith.constant 0 : index
    %2 = vector.load %arg1[%c0_1, %c0_2] : memref<8x128xf32, #tpu.memory_space<vmem>>, vector<8x128xf32>
    tpu.vector_store %arg1[%c0_1, %c0_2], %1 {strides = array<i32>} : memref<8x128xf32, #tpu.memory_space<vmem>>, vector<8x128xf32>,
    return
  }
}

</mosaic_0001>

<llo_original>
// kernel: tpu_custom_call.1
$region0: #{tpu_custom_call.1}
  #allocation0 [shape = 'u32[]', space=smem, size = 0x4, offset = 0x4, fixed_abs, tag = 'smem constant byte address 0x4 - core index']
  #allocation1 [shape = 'u32[144,128]{1,0:T(1,128)}', space=vmem, size = 0x12000, scoped, tag = 'internal scratch']
  %s0 = inlined_call_operand.hbm [shape: f32[8,128], index: 0, kind: input, shape index: {}]
  %s1 = inlined_call_operand.hbm [shape: f32[8,128], index: 1, kind: output, shape index: {}]
  %s2 = sld [smem:[#allocation0]]
  $region18: #{tpu_custom_call.1} parent=0
    _
  %s4 = ssub.s32 1, %s2
  %s5 = scalar_select 0, %s4, %s2
  $region1: #{tpu_custom_call.1} parent=0
    #allocation2 [shape = 'u8[4096]{0}', space=vmem, size = 0x1000, scoped, tag = 'input window, operand 0, single buffered']
    #allocation3 [shape = 's32[1]{0}', space=sflag, size = 0x4, scoped, tag = 'scoped memory for tpu_custom_call.1']
    #allocation4 [shape = 's32[1]{0}', space=sflag, size = 0x4, scoped, tag = 'scoped memory for tpu_custom_call.1']
    #allocation5 [shape = 'u8[4096]{0}', space=vmem, size = 0x1000, scoped, tag = 'output window, operand 0, single buffered']
    %6 = vsyncpa [#allocation3], 0
    %7 = vsyncpa [#allocation4], 0
    // Predicated region
    $region2: #{tpu_custom_call.1} parent=1 // pred_check
      _
    $region3: #{tpu_custom_call.1} parent=1 // pred_check_branch
      %9 = sbr.rel (0) target = $region5
    $region4: #{tpu_custom_call.1} parent=1 // pred_region
      %s11 = ssub.s32 128, 128
      %12 = vsyncadd [#allocation3], %s11
      %s14 = sshll.u32 [#allocation2], 4
      %s15 = int_to_ptr.vmem [resolvable:$true] %s14
      %17 = dma.hbm_to_vmem [thread:$0]  %s0, 128, %s15, [#allocation3]
    $region5: #{tpu_custom_call.1} parent=1 // pred_fallthru
      _
    // Predicated region
    $region6: #{tpu_custom_call.1} parent=1 // pred_check
      _
    $region7: #{tpu_custom_call.1} parent=1 // pred_check_branch
      %19 = sbr.rel (0) target = $region9
    $region8: #{tpu_custom_call.1} parent=1 // pred_region
      %20 = dma.done [#allocation3], 128
    $region9: #{tpu_custom_call.1} parent=1 // pred_fallthru
      _
    %v21 = vld [vmem:[#allocation2] sm:$0xff]
    %22 = vrot.lane.b32.xlu0 %v21, 1
    %v23 = vpop.permute.xlu0 %22
    %24 = vst [vmem:[#allocation5] sm:$0xff] %v23
    // Predicated region
    $region10: #{tpu_custom_call.1} parent=1 // pred_check
      _
    $region11: #{tpu_custom_call.1} parent=1 // pred_check_branch
      %26 = sbr.rel (0) target = $region13
    $region12: #{tpu_custom_call.1} parent=1 // pred_region
      %s28 = ssub.s32 128, 128
      %29 = vsyncadd [#allocation4], %s28
      %s31 = sshll.u32 [#allocation5], 4
      %s32 = int_to_ptr.vmem [resolvable:$true] %s31
      %34 = dma.vmem_to_hbm [thread:$0]  %s32, 128, %s1, [#allocation4]
    $region13: #{tpu_custom_call.1} parent=1 // pred_fallthru
      _
    // Predicated region
    $region14: #{tpu_custom_call.1} parent=1 // pred_check
      _
    $region15: #{tpu_custom_call.1} parent=1 // pred_check_branch
      %36 = sbr.rel (0) target = $region17
    $region16: #{tpu_custom_call.1} parent=1 // pred_region
      %37 = dma.done [#allocation4], 128
    $region17: #{tpu_custom_call.1} parent=1 // pred_fallthru
      _
    %38 = vsyncpa [#allocation3], 1
    %39 = vsyncpa [#allocation4], 1

</llo_original>
